<compile_context>
chip_gen: v5e
topology: v5e:2x2
jax: 0.10.0
libtpu: 0.0.40
codegen_flags: <defaults>
</compile_context>

<pallas_src>
import functools
import math

import jax
import jax.numpy as jnp
from jax.experimental import pallas as pl
from jax.experimental.pallas import tpu as pltpu


_LANE = 128
_SUBLANE = 8


def _round_up(x, m):
    return ((x + m - 1) // m) * m


@functools.lru_cache(maxsize=None)
def _vmem_caps():
    """Generation-aware VMEM limits (bytes) and megacore row-tile requirement."""
    try:
        vmem = int(pltpu.get_tpu_info().vmem_capacity_bytes)
    except Exception:
        vmem = 64 * 2**20                       # conservative fallback: v7x-sized VMEM
    if vmem >= 100 * 2**20:                     # v5e / v6e: 128 MiB per TensorCore
        return {"limit": 100 * 2**20, "pipeline": 64 * 2**20,
                "weights": 20 * 2**20, "min_tiles": 2}
    # v7x-sized VMEM (64 MiB per TensorCore, 2 TensorCores share the row grid)
    return {"limit": 48 * 2**20, "pipeline": 28 * 2**20,
            "weights": 14 * 2**20, "min_tiles": 4}


def _pick_tm(M, per_row_bytes, budget_bytes, min_tiles, cap=1024):
    """Largest power-of-two row tile (multiple of 8) that fits the VMEM budget."""
    tm = cap
    while tm > _SUBLANE and tm * per_row_bytes > budget_bytes:
        tm //= 2
    # don't massively overshoot the problem size
    while tm > _SUBLANE and tm > _round_up(M, _SUBLANE):
        tm //= 2
    # keep >= min_tiles grid steps when there is enough work
    # (pipeline priming; >= 2 tiles per TensorCore on v7x's 'parallel' row axis)
    while tm > 128 and M > 128 * min_tiles and pl.cdiv(M, tm) < min_tiles:
        tm //= 2
    if tm > M:
        tm = M                                  # single full-height block (exemption)
    return max(tm, 1)


def _pick_tk(H, H_out_p, compute_bytes, weight_budget):
    """Hidden (K) tile.  Full H when the (single-buffered, fetched-once) stacked
    weights fit the budget, else a 128-multiple divisor of H (double-buffered)."""
    full_bytes = 2 * H * H_out_p * compute_bytes             # one buffer, both halves
    if full_bytes <= weight_budget:
        return H
    if H % _LANE != 0:
        # TODO(synk): could pad the contraction dim to a 128 multiple instead.
        raise ValueError(
            f"hidden_size={H} is too large for a single K block and not a multiple "
            f"of 128, so it cannot be K-tiled safely; pad hidden_size to a "
            f"multiple of 128.")
    for tk in (2048, 1024, 512, 256, 128):
        if tk < H and H % tk == 0 and 2 * 2 * tk * H_out_p * compute_bytes <= weight_budget:
            return tk
    for tk in (128, 256, 512, 1024):
        if tk < H and H % tk == 0:
            return tk
    return H


# ----------------------------- Pallas kernels -------------------------------


def _mlp_fullk_kernel(x_ref, w_ref, o_ref, *, compute_dtype):
    """o = tanh(xf @ Wf + xb @ Wb), whole hidden dim in one block (no scratch)."""
    xf = x_ref[0].astype(compute_dtype)         # bf16 cast in-register (no-op if bf16)
    xb = x_ref[1].astype(compute_dtype)
    acc = jnp.dot(xf, w_ref[0], preferred_element_type=jnp.float32)
    acc = acc + jnp.dot(xb, w_ref[1], preferred_element_type=jnp.float32)
    o_ref[...] = jnp.tanh(acc).astype(o_ref.dtype)


def _mlp_ktiled_kernel(x_ref, w_ref, o_ref, acc_ref, *, compute_dtype):
    """K-tiled y = tanh(xf @ Wf + xb @ Wb) with an f32 accumulator scratch."""
    k = pl.program_id(1)
    xf = x_ref[0].astype(compute_dtype)
    xb = x_ref[1].astype(compute_dtype)
    part = jnp.dot(xf, w_ref[0], preferred_element_type=jnp.float32)
    part = part + jnp.dot(xb, w_ref[1], preferred_element_type=jnp.float32)

    @pl.when(k == 0)
    def _():
        acc_ref[...] = part                     # direct assign: no zero-fill pass

    @pl.when(k != 0)
    def _():
        acc_ref[...] += part                    # single fused RMW per K step

    @pl.when(k == pl.num_programs(1) - 1)
    def _():
        o_ref[...] = jnp.tanh(acc_ref[...]).astype(o_ref.dtype)


def _sum_kernel(x_ref, o_ref):
    o_ref[...] = (x_ref[0] + x_ref[1]).astype(o_ref.dtype)


# ------------------------------ wrappers -------------------------------------


def mlp_aggregate(x2, w2, h_out):
    """x2: (2, M, H) stacked fwd/bwd rows (NOT pre-sliced — avoids an extra HBM pass).
    w2: (2, H, H_out_p) stacked, pre-transposed, compute-dtype, lane-padded weights.
    Returns (M, h_out)."""
    _, M, H = x2.shape
    H_out_p = w2.shape[2]
    caps = _vmem_caps()
    compute_bytes = jnp.dtype(w2.dtype).itemsize
    in_bytes = jnp.dtype(x2.dtype).itemsize
    out_bytes = in_bytes

    tk = _pick_tk(H, H_out_p, compute_bytes, caps["weights"])
    num_k = max(H // tk, 1)

    if num_k == 1:
        weight_bytes = 2 * H * H_out_p * compute_bytes              # single-buffered
        per_row = 2 * 2 * H * in_bytes + 2 * H_out_p * out_bytes
    else:
        weight_bytes = 2 * 2 * tk * H_out_p * compute_bytes         # double-buffered
        per_row = 2 * 2 * tk * in_bytes + 2 * H_out_p * out_bytes + H_out_p * 4
    budget = max(caps["pipeline"] - weight_bytes, 2 * 2**20)
    tm = _pick_tm(M, per_row, budget, caps["min_tiles"])

    out_shape = jax.ShapeDtypeStruct((M, H_out_p), x2.dtype)
    cparams = pltpu.CompilerParams(
        dimension_semantics=("parallel",) if num_k == 1 else ("parallel", "arbitrary"),
        vmem_limit_bytes=caps["limit"])

    if num_k == 1:
        kernel = functools.partial(_mlp_fullk_kernel, compute_dtype=w2.dtype)

        def run(single_buffer_weights):
            wkw = {"pipeline_mode": pl.Buffered(1)} if single_buffer_weights else {}
            return pl.pallas_call(
                kernel,
                out_shape=out_shape,
                grid_spec=pltpu.PrefetchScalarGridSpec(
                    num_scalar_prefetch=0,
                    grid=(pl.cdiv(M, tm),),
                    in_specs=[
                        pl.BlockSpec((2, tm, H), lambda i: (0, i, 0)),
                        # constant block index -> weights DMA'd from HBM exactly once
                        pl.BlockSpec((2, H, H_out_p), lambda i: (0, 0, 0), **wkw),
                    ],
                    out_specs=pl.BlockSpec((tm, H_out_p), lambda i: (i, 0)),
                ),
                compiler_params=cparams,
            )(x2, w2)

        try:
            out = run(True)
        except Exception:
            # fall back to default double-buffered weights on older lowerings
            out = run(False)
    else:
        kernel = functools.partial(_mlp_ktiled_kernel, compute_dtype=w2.dtype)
        out = pl.pallas_call(
            kernel,
            out_shape=out_shape,
            grid_spec=pltpu.PrefetchScalarGridSpec(
                num_scalar_prefetch=0,
                grid=(pl.cdiv(M, tm), num_k),
                in_specs=[
                    pl.BlockSpec((2, tm, tk), lambda i, k: (0, i, k)),
                    pl.BlockSpec((2, tk, H_out_p), lambda i, k: (0, k, 0)),
                ],
                out_specs=pl.BlockSpec((tm, H_out_p), lambda i, k: (i, 0)),
                scratch_shapes=[pltpu.VMEM((tm, H_out_p), jnp.float32)],
            ),
            compiler_params=cparams,
        )(x2, w2)

    if H_out_p != h_out:
        # TODO(synk): for narrow H this slice is one extra output-sized HBM pass; a
        # consumer that accepts the lane-padded (M, H_out_p) slab could fuse it away.
        out = out[:, :h_out]
    return out


def sum_aggregate(x2):
    """x2: (2, M, W) stacked fwd/bwd, lane-dense last dim.  Returns (M, W).
    TODO(synk): a plain XLA `x2[0] + x2[1]` runs at the same HBM roofline; the Pallas
    path is kept so the aggregation stays a single fused custom call."""
    _, M, W = x2.shape
    caps = _vmem_caps()
    itemsize = jnp.dtype(x2.dtype).itemsize
    per_row = (2 * 2 + 2) * W * itemsize        # stacked input + output, double-buffered
    tm = _pick_tm(M, per_row, caps["pipeline"], caps["min_tiles"])
    return pl.pallas_call(
        _sum_kernel,
        out_shape=jax.ShapeDtypeStruct((M, W), x2.dtype),
        grid_spec=pltpu.PrefetchScalarGridSpec(
            num_scalar_prefetch=0,
            grid=(pl.cdiv(M, tm),),
            in_specs=[pl.BlockSpec((2, tm, W), lambda i: (0, i, 0))],
            out_specs=pl.BlockSpec((tm, W), lambda i: (i, 0)),
        ),
        compiler_params=pltpu.CompilerParams(
            dimension_semantics=("parallel",),
            vmem_limit_bytes=caps["limit"]),
    )(x2)


# ------------------------------- module port ----------------------------------


class BidirectionalRNNAggregator:
    """JAX/Pallas port of the PyTorch module."""

    def __init__(self, params, key=None, compute_dtype=jnp.bfloat16):
        self.aggregator_method = params["bidirectional_rnn_outputs_aggregator"]
        assert self.aggregator_method in {"none", "sum", "concat", "mlp"}
        self.hidden_size = params["hidden_size"]
        self.compute_dtype = compute_dtype
        self.w_proj = None
        self.w2 = None
        if self.aggregator_method == "mlp":
            # nn.Linear(2H, H, bias=False): weight shape (H, 2H). Deterministic init.
            if key is None:
                key = jax.random.PRNGKey(42)
            H = self.hidden_size
            bound = 1.0 / math.sqrt(2.0 * H)
            self.w_proj = jax.random.uniform(
                key, (H, 2 * H), minval=-bound, maxval=bound, dtype=jnp.float32)
            self._prepare_weights()

    def _prepare_weights(self):
        """Split / transpose / cast / lane-pad / stack the projection ONCE."""
        H = self.hidden_size
        h_out_p = _round_up(H, _LANE)           # lane-dense output for ANY H
        wf = self.w_proj[:, :H].T               # (H, H): acts on the fwd half
        wb = self.w_proj[:, H:].T               # (H, H): acts on the bwd half
        w2 = jnp.stack([wf, wb]).astype(self.compute_dtype)     # (2, H, H)
        if h_out_p != H:
            w2 = jnp.pad(w2, ((0, 0), (0, 0), (0, h_out_p - H)))
        self.w2 = w2

    def __call__(self, inputs, direction_dim, data_dim):
        nd_in = inputs.ndim
        direction_dim = direction_dim % nd_in
        data_dim = data_dim % nd_in
        assert inputs.shape[direction_dim] == 2

        # Move the direction axis to the front instead of slicing the two halves out:
        # the kernels read x2[0] / x2[1] from the SAME stacked operand, so the
        # per-direction tensors are never materialized in HBM (moveaxis is a no-op
        # when direction_dim == 0, the usual bidirectional-RNN layout).
        x2 = inputs if direction_dim == 0 else jnp.moveaxis(inputs, direction_dim, 0)
        if data_dim > direction_dim:
            data_dim -= 1                       # now indexes the per-direction shape
        per_shape = x2.shape[1:]

        if self.aggregator_method == "none":
            raise NotImplementedError()         # matches the PyTorch module
        if self.aggregator_method == "concat":
            # pure data movement — XLA's concatenate already runs at HBM roofline
            return jnp.concatenate([x2[0], x2[1]], axis=data_dim)
        if self.aggregator_method == "sum":
            n = math.prod(per_shape)
            width = next((w for w in (4096, 2048, 1024, 512, 256, 128) if n % w == 0),
                         per_shape[-1])
            out = sum_aggregate(x2.reshape(2, n // width, width))
            return out.reshape(per_shape)

        # 'mlp': concat along the hidden (last) axis + Linear(2H->H, no bias) + tanh,
        # fused in the Pallas kernel as tanh(xf @ Wf + xb @ Wb).
        nd = len(per_shape)
        assert data_dim == nd - 1, \
            "mlp aggregator concatenates along the hidden (last) axis"
        H = per_shape[-1]
        assert H == self.hidden_size
        M = math.prod(per_shape[:-1])
        out = mlp_aggregate(x2.reshape(2, M, H), self.w2, self.hidden_size)
        return out.reshape(*per_shape[:-1], self.hidden_size)


# ------------------------------- demo / test ---------------------------------

if __name__ == "__main__":
    B, T, H = 2, 8, 32
    key = jax.random.PRNGKey(0)
    k_in, k_w = jax.random.split(key)

    # bidirectional RNN outputs: (2, B, T, H); direction_dim=0, data_dim=3 (hidden)
    inputs = jax.random.normal(k_in, (2, B, T, H), dtype=jnp.float32)

    # --- mlp path (hot path: fused concat + bf16 matmul + tanh) ---
    params = {"bidirectional_rnn_outputs_aggregator": "mlp", "hidden_size": H}
    agg = BidirectionalRNNAggregator(params, key=k_w)
    out = jax.block_until_ready(agg(inputs, direction_dim=0, data_dim=3))
    assert out.shape == (B, T, H), out.shape

    # pure-JAX f32 reference (kernel does the matmul in bf16 on the MXU)
    cat = jnp.concatenate([inputs[0], inputs[1]], axis=-1)        # (B, T, 2H)
    ref = jnp.tanh(cat @ agg.w_proj.T)                             # (B, T, H)
    err = float(jnp.max(jnp.abs(out - ref)))
    assert err < 4e-2, err

    # --- sum path ---
    agg_sum = BidirectionalRNNAggregator(
        {"bidirectional_rnn_outputs_aggregator": "sum", "hidden_size": H})
    out_sum = jax.block_until_ready(agg_sum(inputs, direction_dim=0, data_dim=3))
    assert out_sum.shape == (B, T, H)
    assert jnp.allclose(out_sum, inputs[0] + inputs[1], atol=1e-6)

    # --- concat path ---
    agg_cat = BidirectionalRNNAggregator(
        {"bidirectional_rnn_outputs_aggregator": "concat", "hidden_size": H})
    out_cat = jax.block_until_ready(agg_cat(inputs, direction_dim=0, data_dim=3))
    assert out_cat.shape == (B, T, 2 * H)

    print("KERNEL_OK")
</pallas_src>

<mosaic_0001>
module attributes {stable_mosaic.version = 11 : i64} {
  func.func @_mlp_fullk_kernel(%arg0: i32, %arg1: memref<2x16x32xf32, #tpu.memory_space<vmem>>, %arg2: memref<2x32x128xbf16, #tpu.memory_space<vmem>>, %arg3: memref<16x128xf32, #tpu.memory_space<vmem>>) attributes {dimension_semantics = [#tpu.dimension_semantics<parallel>], iteration_bounds = array<i64: 1>, scalar_prefetch = 0 : i64, scratch_operands = 0 : i64, tpu.core_type = #tpu.core_type<tc>, window_params = [{transform_indices = @transform_0, window_bounds = array<i64: 2, 16, 32>}, {pipeline_mode = #tpu.pipeline_mode<synchronous>, transform_indices = @transform_1, window_bounds = array<i64: 2, 32, 128>}, {transform_indices = @transform_2, window_bounds = array<i64: 16, 128>}]} {
    %c0 = arith.constant 0 : index
    %c0_0 = arith.constant 0 : index
    %c0_1 = arith.constant 0 : index
    %0 = vector.load %arg1[%c0, %c0_0, %c0_1] : memref<2x16x32xf32, #tpu.memory_space<vmem>>, vector<1x16x32xf32>
    %1 = vector.shape_cast %0 : vector<1x16x32xf32> to vector<16x32xf32>
    %2 = arith.truncf %1 : vector<16x32xf32> to vector<16x32xbf16>
    %c1 = arith.constant 1 : index
    %c0_2 = arith.constant 0 : index
    %c0_3 = arith.constant 0 : index
    %3 = vector.load %arg1[%c1, %c0_2, %c0_3] : memref<2x16x32xf32, #tpu.memory_space<vmem>>, vector<1x16x32xf32>
    %4 = vector.shape_cast %3 : vector<1x16x32xf32> to vector<16x32xf32>
    %5 = arith.truncf %4 : vector<16x32xf32> to vector<16x32xbf16>
    %c0_4 = arith.constant 0 : index
    %c0_5 = arith.constant 0 : index
    %c0_6 = arith.constant 0 : index
    %6 = vector.load %arg2[%c0_4, %c0_5, %c0_6] : memref<2x32x128xbf16, #tpu.memory_space<vmem>>, vector<1x32x128xbf16>
    %7 = vector.shape_cast %6 : vector<1x32x128xbf16> to vector<32x128xbf16>
    %cst = arith.constant dense<0.000000e+00> : vector<16x128xf32>
    %8 = tpu.matmul %2, %7, %cst {dimension_numbers = #tpu.dot_dimension_numbers<[1], [0], [0], [1], [0, 0, 1, 1], [], []>} : vector<16x32xbf16>, vector<32x128xbf16>, vector<16x128xf32> -> vector<16x128xf32>
    %c1_7 = arith.constant 1 : index
    %c0_8 = arith.constant 0 : index
    %c0_9 = arith.constant 0 : index
    %9 = vector.load %arg2[%c1_7, %c0_8, %c0_9] : memref<2x32x128xbf16, #tpu.memory_space<vmem>>, vector<1x32x128xbf16>
    %10 = vector.shape_cast %9 : vector<1x32x128xbf16> to vector<32x128xbf16>
    %cst_10 = arith.constant dense<0.000000e+00> : vector<16x128xf32>
    %11 = tpu.matmul %5, %10, %cst_10 {dimension_numbers = #tpu.dot_dimension_numbers<[1], [0], [0], [1], [0, 0, 1, 1], [], []>} : vector<16x32xbf16>, vector<32x128xbf16>, vector<16x128xf32> -> vector<16x128xf32>
    %12 = arith.addf %8, %11 : vector<16x128xf32>
    %13 = math.tanh %12 : vector<16x128xf32>
    %c0_11 = arith.constant 0 : index
    %c0_12 = arith.constant 0 : index
    %14 = vector.load %arg3[%c0_11, %c0_12] : memref<16x128xf32, #tpu.memory_space<vmem>>, vector<16x128xf32>
    tpu.vector_store %arg3[%c0_11, %c0_12], %13 {strides = array<i32>} : memref<16x128xf32, #tpu.memory_space<vmem>>, vector<16x128xf32>,
    return
  }
  func.func @transform_0(%arg0: i32) -> (i32, i32, i32) {
    %c0_i32 = arith.constant 0 : i32
    %c0_i32_0 = arith.constant 0 : i32
    %c0_i32_1 = arith.constant 0 : i32
    return %c0_i32, %arg0, %c0_i32_0 : i32, i32, i32
  }
  func.func @transform_1(%arg0: i32) -> (i32, i32, i32) {
    %c0_i32 = arith.constant 0 : i32
    %c0_i32_0 = arith.constant 0 : i32
    %c0_i32_1 = arith.constant 0 : i32
    %c0_i32_2 = arith.constant 0 : i32
    return %c0_i32, %c0_i32_0, %c0_i32_1 : i32, i32, i32
  }
  func.func @transform_2(%arg0: i32) -> (i32, i32) {
    %c0_i32 = arith.constant 0 : i32
    %c0_i32_0 = arith.constant 0 : i32
    return %arg0, %c0_i32 : i32, i32
  }
}

module attributes {stable_mosaic.version = 11 : i64} {
  func.func @_mlp_fullk_kernel(%arg0: i32, %arg1: memref<2x16x32xf32, #tpu.memory_space<vmem>>, %arg2: memref<2x32x128xbf16, #tpu.memory_space<vmem>>, %arg3: memref<16x128xf32, #tpu.memory_space<vmem>>) attributes {dimension_semantics = [#tpu.dimension_semantics<parallel>], iteration_bounds = array<i64: 1>, scalar_prefetch = 0 : i64, scratch_operands = 0 : i64, tpu.core_type = #tpu.core_type<tc>, window_params = [{transform_indices = @transform_0, window_bounds = array<i64: 2, 16, 32>}, {pipeline_mode = #tpu.pipeline_mode<synchronous>, transform_indices = @transform_1, window_bounds = array<i64: 2, 32, 128>}, {transform_indices = @transform_2, window_bounds = array<i64: 16, 128>}]} {
    %c0 = arith.constant 0 : index
    %c0_0 = arith.constant 0 : index
    %c0_1 = arith.constant 0 : index
    %0 = vector.load %arg1[%c0, %c0_0, %c0_1] : memref<2x16x32xf32, #tpu.memory_space<vmem>>, vector<1x16x32xf32>
    %1 = vector.shape_cast %0 : vector<1x16x32xf32> to vector<16x32xf32>
    %2 = arith.truncf %1 : vector<16x32xf32> to vector<16x32xbf16>
    %c1 = arith.constant 1 : index
    %c0_2 = arith.constant 0 : index
    %c0_3 = arith.constant 0 : index
    %3 = vector.load %arg1[%c1, %c0_2, %c0_3] : memref<2x16x32xf32, #tpu.memory_space<vmem>>, vector<1x16x32xf32>
    %4 = vector.shape_cast %3 : vector<1x16x32xf32> to vector<16x32xf32>
    %5 = arith.truncf %4 : vector<16x32xf32> to vector<16x32xbf16>
    %c0_4 = arith.constant 0 : index
    %c0_5 = arith.constant 0 : index
    %c0_6 = arith.constant 0 : index
    %6 = vector.load %arg2[%c0_4, %c0_5, %c0_6] : memref<2x32x128xbf16, #tpu.memory_space<vmem>>, vector<1x32x128xbf16>
    %7 = vector.shape_cast %6 : vector<1x32x128xbf16> to vector<32x128xbf16>
    %cst = arith.constant dense<0.000000e+00> : vector<16x128xf32>
    %8 = tpu.matmul %2, %7, %cst {dimension_numbers = #tpu.dot_dimension_numbers<[1], [0], [0], [1], [0, 0, 1, 1], [], []>} : vector<16x32xbf16>, vector<32x128xbf16>, vector<16x128xf32> -> vector<16x128xf32>
    %c1_7 = arith.constant 1 : index
    %c0_8 = arith.constant 0 : index
    %c0_9 = arith.constant 0 : index
    %9 = vector.load %arg2[%c1_7, %c0_8, %c0_9] : memref<2x32x128xbf16, #tpu.memory_space<vmem>>, vector<1x32x128xbf16>
    %10 = vector.shape_cast %9 : vector<1x32x128xbf16> to vector<32x128xbf16>
    %cst_10 = arith.constant dense<0.000000e+00> : vector<16x128xf32>
    %11 = tpu.matmul %5, %10, %cst_10 {dimension_numbers = #tpu.dot_dimension_numbers<[1], [0], [0], [1], [0, 0, 1, 1], [], []>} : vector<16x32xbf16>, vector<32x128xbf16>, vector<16x128xf32> -> vector<16x128xf32>
    %12 = arith.addf %8, %11 : vector<16x128xf32>
    %13 = math.tanh %12 : vector<16x128xf32>
    %c0_11 = arith.constant 0 : index
    %c0_12 = arith.constant 0 : index
    %14 = vector.load %arg3[%c0_11, %c0_12] : memref<16x128xf32, #tpu.memory_space<vmem>>, vector<16x128xf32>
    tpu.vector_store %arg3[%c0_11, %c0_12], %13 {strides = array<i32>} : memref<16x128xf32, #tpu.memory_space<vmem>>, vector<16x128xf32>,
    return
  }
  func.func @transform_0(%arg0: i32) -> (i32, i32, i32) {
    %c0_i32 = arith.constant 0 : i32
    %c0_i32_0 = arith.constant 0 : i32
    %c0_i32_1 = arith.constant 0 : i32
    return %c0_i32, %arg0, %c0_i32_0 : i32, i32, i32
  }
  func.func @transform_1(%arg0: i32) -> (i32, i32, i32) {
    %c0_i32 = arith.constant 0 : i32
    %c0_i32_0 = arith.constant 0 : i32
    %c0_i32_1 = arith.constant 0 : i32
    %c0_i32_2 = arith.constant 0 : i32
    return %c0_i32, %c0_i32_0, %c0_i32_1 : i32, i32, i32
  }
  func.func @transform_2(%arg0: i32) -> (i32, i32) {
    %c0_i32 = arith.constant 0 : i32
    %c0_i32_0 = arith.constant 0 : i32
    return %arg0, %c0_i32 : i32, i32
  }
}

</mosaic_0001>

<llo_original>
// kernel: tpu_custom_call.1
$region0: #{tpu_custom_call.1}
  #allocation0 [shape = 'u32[]', space=smem, size = 0x4, offset = 0x4, fixed_abs, tag = 'smem constant byte address 0x4 - core index']
  #allocation1 [shape = 'u32[72,128]{1,0:T(1,128)}', space=vmem, size = 0x9000, scoped, tag = 'internal scratch']
  %s0 = inlined_call_operand.hbm [shape: f32[2,16,32], index: 0, kind: input, shape index: {}]
  %s1 = inlined_call_operand.hbm [shape: bf16[2,32,128], index: 1, kind: input, shape index: {}]
  %s2 = inlined_call_operand.hbm [shape: f32[16,128], index: 2, kind: output, shape index: {}]
  %s3 = sld [smem:[#allocation0]]
  $region26: #{tpu_custom_call.1} parent=0
    _
  %s5 = ssub.s32 1, %s3
  %s6 = scalar_select 0, %s5, %s3
  $region1: #{tpu_custom_call.1} parent=0
    #allocation2 [shape = 'u8[16384]{0}', space=vmem, size = 0x4000, scoped, tag = 'input window, operand 0, single buffered']
    #allocation3 [shape = 's32[1]{0}', space=sflag, size = 0x4, scoped, tag = 'scoped memory for tpu_custom_call.1']
    #allocation4 [shape = 's32[1]{0}', space=sflag, size = 0x4, scoped, tag = 'scoped memory for tpu_custom_call.1']
    #allocation5 [shape = 'u8[16384]{0}', space=vmem, size = 0x4000, scoped, tag = 'input window, operand 1, single buffered']
    #allocation6 [shape = 's32[1]{0}', space=sflag, size = 0x4, scoped, tag = 'scoped memory for tpu_custom_call.1']
    #allocation7 [shape = 'u8[8192]{0}', space=vmem, size = 0x2000, scoped, tag = 'output window, operand 0, single buffered']
    %7 = vsyncpa [#allocation3], 0
    %8 = vsyncpa [#allocation6], 0
    %9 = vsyncpa [#allocation4], 0
    // Predicated region
    $region2: #{tpu_custom_call.1} parent=1 // pred_check
      _
    $region3: #{tpu_custom_call.1} parent=1 // pred_check_branch
      %11 = sbr.rel (0) target = $region5
    $region4: #{tpu_custom_call.1} parent=1 // pred_region
      %13 = vsyncadd [#allocation3], 0
      %s14 = sshll.u32 %s0, 4
      %s15 = int_to_ptr.hbm [resolvable:$true] %s14
      %s16 = sshll.u32 [#allocation2], 4
      %s17 = int_to_ptr.vmem [resolvable:$true] %s16
      %22 = dma.hbm_to_vmem [thread:$0]  %s15, 512, %s17, [#allocation3], 128, 128, 8
    $region5: #{tpu_custom_call.1} parent=1 // pred_fallthru
      _
    // Predicated region
    $region6: #{tpu_custom_call.1} parent=1 // pred_check
      _
    $region7: #{tpu_custom_call.1} parent=1 // pred_check_branch
      %24 = sbr.rel (0) target = $region9
    $region8: #{tpu_custom_call.1} parent=1 // pred_region
      %26 = vsyncadd [#allocation6], 0
      %s27 = sshll.u32 %s1, 4
      %s28 = int_to_ptr.hbm [resolvable:$true] %s27
      %s29 = sshll.u32 [#allocation5], 4
      %s30 = int_to_ptr.vmem [resolvable:$true] %s29
      %35 = dma.hbm_to_vmem [thread:$0]  %s28, 512, %s30, [#allocation6], 64, 64, 4
    $region9: #{tpu_custom_call.1} parent=1 // pred_fallthru
      _
    // Predicated region
    $region10: #{tpu_custom_call.1} parent=1 // pred_check
      _
    $region11: #{tpu_custom_call.1} parent=1 // pred_check_branch
      %37 = sbr.rel (0) target = $region13
    $region12: #{tpu_custom_call.1} parent=1 // pred_region
      %39 = dma.done [#allocation3], 512
    $region13: #{tpu_custom_call.1} parent=1 // pred_fallthru
      _
    // Predicated region
    $region14: #{tpu_custom_call.1} parent=1 // pred_check
      _
    $region15: #{tpu_custom_call.1} parent=1 // pred_check_branch
      %41 = sbr.rel (0) target = $region17
    $region16: #{tpu_custom_call.1} parent=1 // pred_region
      %43 = dma.done [#allocation6], 512
    $region17: #{tpu_custom_call.1} parent=1 // pred_fallthru
      _
    %v45 = vld [vmem:[#allocation2] sm:$0xff]
    %v46 = vld [vmem:[#allocation2 + $0x8] sm:$0xff]
    %v47 = vpack.c.bf16 %v46, %v45
    %s48 = scalar_lea.vmem [#allocation2], 16
    %v49 = vld [vmem:[%s48] sm:$0xff]
    %v50 = vld [vmem:[%s48 + $0x8] sm:$0xff]
    %v51 = vpack.c.bf16 %v50, %v49
    %v52 = vld [vmem:[#allocation5] sm:$0xf]
    %v53 = vld [vmem:[#allocation5 + $0x4] sm:$0xf]
    %v54 = vld [vmem:[#allocation5 + $0x8] sm:$0xf]
    %v55 = vld [vmem:[#allocation5 + $0xc] sm:$0xf]
    %s56 = scalar_lea.vmem [#allocation5], 16
    %v57 = vld [vmem:[%s56] sm:$0xf]
    %v58 = vld [vmem:[%s56 + $0x4] sm:$0xf]
    %v59 = vld [vmem:[%s56 + $0x8] sm:$0xf]
    %v60 = vld [vmem:[%s56 + $0xc] sm:$0xf]
    %v65 = vunpack.c.l.b16 %v57
    %v66 = vunpack.c.l.b16 %v58
    %v67 = vunpack.c.l.b16 %v59
    %v68 = vunpack.c.l.b16 %v60
    %v69 = vpack.c.b16 %v66, %v65
    %v70 = vpack.c.b16 %v68, %v67
    %vm73 = vcmask 261120
    %v75 = vsel %vm73, %v51, 0
    %77 = vmatpush.bf16.msra.mxu0 0
    %78 = vmatpush.bf16.msra.mxu0 0
    %79 = vmatpush.bf16.msra.mxu0 0
    %80 = vmatpush.bf16.msra.mxu0 0
    %81 = vmatpush.bf16.msra.mxu0 0
    %82 = vmatpush.bf16.msra.mxu0 0
    %83 = vmatpush.bf16.msra.mxu0 %v70
    %84 = vmatpush.bf16.msra.mxu0 %v69
    %85 = vmatmul.bf16.gmra.mxu0 %v75
    %v86 = vpop.f32.mrf.mxu0
    %v87 = vadd.f32 0.0, %v86
    %v88 = vpop.f32.mrf.mxu0
    %v89 = vadd.f32 0.0, %v88
    %90 = vdwg.mxu0
    %v95 = vunpack.c.l.b16 %v52
    %v96 = vunpack.c.l.b16 %v53
    %v97 = vunpack.c.l.b16 %v54
    %v98 = vunpack.c.l.b16 %v55
    %v99 = vpack.c.b16 %v96, %v95
    %v100 = vpack.c.b16 %v98, %v97
    %v104 = vsel %vm73, %v47, 0
    %106 = vmatpush.bf16.msra.mxu0 0
    %107 = vmatpush.bf16.msra.mxu0 0
    %108 = vmatpush.bf16.msra.mxu0 0
    %109 = vmatpush.bf16.msra.mxu0 0
    %110 = vmatpush.bf16.msra.mxu0 0
    %111 = vmatpush.bf16.msra.mxu0 0
    %112 = vmatpush.bf16.msra.mxu0 %v100
    %113 = vmatpush.bf16.msra.mxu0 %v99
    %114 = vmatmul.bf16.gmra.mxu0 %v104
    %v115 = vpop.f32.mrf.mxu0
    %v116 = vadd.f32 %v87, %v115
    %v117 = vpop.f32.mrf.mxu0
    %v118 = vadd.f32 %v89, %v117
    %119 = vdwg.mxu0
    %v120 = vtanh.pop %v116
    %v121 = vtanh.pop %v118
    %122 = vst [vmem:[#allocation7] sm:$0xff] %v120
    %123 = vst [vmem:[#allocation7 + $0x8] sm:$0xff] %v121
    // Predicated region
    $region18: #{tpu_custom_call.1} parent=1 // pred_check
      _
    $region19: #{tpu_custom_call.1} parent=1 // pred_check_branch
      %125 = sbr.rel (0) target = $region21
    $region20: #{tpu_custom_call.1} parent=1 // pred_region
      %127 = vsyncadd [#allocation4], 0
      %s128 = sshll.u32 [#allocation7], 4
      %s129 = int_to_ptr.vmem [resolvable:$true] %s128
      %s130 = sshll.u32 %s2, 4
      %s131 = int_to_ptr.hbm [resolvable:$true] %s130
      %136 = dma.vmem_to_hbm [thread:$0]  %s129, 256, %s131, [#allocation4], 128, 128, 8
    $region21: #{tpu_custom_call.1} parent=1 // pred_fallthru
      _
    // Predicated region
    $region22: #{tpu_custom_call.1} parent=1 // pred_check
      _
    $region23: #{tpu_custom_call.1} parent=1 // pred_check_branch
      %138 = sbr.rel (0) target = $region25
    $region24: #{tpu_custom_call.1} parent=1 // pred_region
      %140 = dma.done [#allocation4], 256
    $region25: #{tpu_custom_call.1} parent=1 // pred_fallthru
      _
    %141 = vsyncpa [#allocation3], 1
    %142 = vsyncpa [#allocation6], 1
    %143 = vsyncpa [#allocation4], 1

// kernel: tpu_custom_call.1
$region0: #{tpu_custom_call.1}
  #allocation0 [shape = 'u32[]', space=smem, size = 0x4, offset = 0x4, fixed_abs, tag = 'smem constant byte address 0x4 - core index']
  #allocation1 [shape = 'u32[72,128]{1,0:T(1,128)}', space=vmem, size = 0x9000, scoped, tag = 'internal scratch']
  %s0 = inlined_call_operand.hbm [shape: f32[2,16,32], index: 0, kind: input, shape index: {}]
  %s1 = inlined_call_operand.hbm [shape: bf16[2,32,128], index: 1, kind: input, shape index: {}]
  %s2 = inlined_call_operand.hbm [shape: f32[16,128], index: 2, kind: output, shape index: {}]
  %s3 = sld [smem:[#allocation0]]
  $region26: #{tpu_custom_call.1} parent=0
    _
  %s5 = ssub.s32 1, %s3
  %s6 = scalar_select 0, %s5, %s3
  $region1: #{tpu_custom_call.1} parent=0
    #allocation2 [shape = 'u8[16384]{0}', space=vmem, size = 0x4000, scoped, tag = 'input window, operand 0, single buffered']
    #allocation3 [shape = 's32[1]{0}', space=sflag, size = 0x4, scoped, tag = 'scoped memory for tpu_custom_call.1']
    #allocation4 [shape = 's32[1]{0}', space=sflag, size = 0x4, scoped, tag = 'scoped memory for tpu_custom_call.1']
    #allocation5 [shape = 'u8[16384]{0}', space=vmem, size = 0x4000, scoped, tag = 'input window, operand 1, single buffered']
    #allocation6 [shape = 's32[1]{0}', space=sflag, size = 0x4, scoped, tag = 'scoped memory for tpu_custom_call.1']
    #allocation7 [shape = 'u8[8192]{0}', space=vmem, size = 0x2000, scoped, tag = 'output window, operand 0, single buffered']
    %7 = vsyncpa [#allocation3], 0
    %8 = vsyncpa [#allocation6], 0
    %9 = vsyncpa [#allocation4], 0
    // Predicated region
    $region2: #{tpu_custom_call.1} parent=1 // pred_check
      _
    $region3: #{tpu_custom_call.1} parent=1 // pred_check_branch
      %11 = sbr.rel (0) target = $region5
    $region4: #{tpu_custom_call.1} parent=1 // pred_region
      %13 = vsyncadd [#allocation3], 0
      %s14 = sshll.u32 %s0, 4
      %s15 = int_to_ptr.hbm [resolvable:$true] %s14
      %s16 = sshll.u32 [#allocation2], 4
      %s17 = int_to_ptr.vmem [resolvable:$true] %s16
      %22 = dma.hbm_to_vmem [thread:$0]  %s15, 512, %s17, [#allocation3], 128, 128, 8
    $region5: #{tpu_custom_call.1} parent=1 // pred_fallthru
      _
    // Predicated region
    $region6: #{tpu_custom_call.1} parent=1 // pred_check
      _
    $region7: #{tpu_custom_call.1} parent=1 // pred_check_branch
      %24 = sbr.rel (0) target = $region9
    $region8: #{tpu_custom_call.1} parent=1 // pred_region
      %26 = vsyncadd [#allocation6], 0
      %s27 = sshll.u32 %s1, 4
      %s28 = int_to_ptr.hbm [resolvable:$true] %s27
      %s29 = sshll.u32 [#allocation5], 4
      %s30 = int_to_ptr.vmem [resolvable:$true] %s29
      %35 = dma.hbm_to_vmem [thread:$0]  %s28, 512, %s30, [#allocation6], 64, 64, 4
    $region9: #{tpu_custom_call.1} parent=1 // pred_fallthru
      _
    // Predicated region
    $region10: #{tpu_custom_call.1} parent=1 // pred_check
      _
    $region11: #{tpu_custom_call.1} parent=1 // pred_check_branch
      %37 = sbr.rel (0) target = $region13
    $region12: #{tpu_custom_call.1} parent=1 // pred_region
      %39 = dma.done [#allocation3], 512
    $region13: #{tpu_custom_call.1} parent=1 // pred_fallthru
      _
    // Predicated region
    $region14: #{tpu_custom_call.1} parent=1 // pred_check
      _
    $region15: #{tpu_custom_call.1} parent=1 // pred_check_branch
      %41 = sbr.rel (0) target = $region17
    $region16: #{tpu_custom_call.1} parent=1 // pred_region
      %43 = dma.done [#allocation6], 512
    $region17: #{tpu_custom_call.1} parent=1 // pred_fallthru
      _
    %v45 = vld [vmem:[#allocation2] sm:$0xff]
    %v46 = vld [vmem:[#allocation2 + $0x8] sm:$0xff]
    %v47 = vpack.c.bf16 %v46, %v45
    %s48 = scalar_lea.vmem [#allocation2], 16
    %v49 = vld [vmem:[%s48] sm:$0xff]
    %v50 = vld [vmem:[%s48 + $0x8] sm:$0xff]
    %v51 = vpack.c.bf16 %v50, %v49
    %v52 = vld [vmem:[#allocation5] sm:$0xf]
    %v53 = vld [vmem:[#allocation5 + $0x4] sm:$0xf]
    %v54 = vld [vmem:[#allocation5 + $0x8] sm:$0xf]
    %v55 = vld [vmem:[#allocation5 + $0xc] sm:$0xf]
    %s56 = scalar_lea.vmem [#allocation5], 16
    %v57 = vld [vmem:[%s56] sm:$0xf]
    %v58 = vld [vmem:[%s56 + $0x4] sm:$0xf]
    %v59 = vld [vmem:[%s56 + $0x8] sm:$0xf]
    %v60 = vld [vmem:[%s56 + $0xc] sm:$0xf]
    %v65 = vunpack.c.l.b16 %v57
    %v66 = vunpack.c.l.b16 %v58
    %v67 = vunpack.c.l.b16 %v59
    %v68 = vunpack.c.l.b16 %v60
    %v69 = vpack.c.b16 %v66, %v65
    %v70 = vpack.c.b16 %v68, %v67
    %vm73 = vcmask 261120
    %v75 = vsel %vm73, %v51, 0
    %77 = vmatpush.bf16.msra.mxu0 0
    %78 = vmatpush.bf16.msra.mxu0 0
    %79 = vmatpush.bf16.msra.mxu0 0
    %80 = vmatpush.bf16.msra.mxu0 0
    %81 = vmatpush.bf16.msra.mxu0 0
    %82 = vmatpush.bf16.msra.mxu0 0
    %83 = vmatpush.bf16.msra.mxu0 %v70
    %84 = vmatpush.bf16.msra.mxu0 %v69
    %85 = vmatmul.bf16.gmra.mxu0 %v75
    %v86 = vpop.f32.mrf.mxu0
    %v87 = vadd.f32 0.0, %v86
    %v88 = vpop.f32.mrf.mxu0
    %v89 = vadd.f32 0.0, %v88
    %90 = vdwg.mxu0
    %v95 = vunpack.c.l.b16 %v52
    %v96 = vunpack.c.l.b16 %v53
    %v97 = vunpack.c.l.b16 %v54
    %v98 = vunpack.c.l.b16 %v55
    %v99 = vpack.c.b16 %v96, %v95
    %v100 = vpack.c.b16 %v98, %v97
    %v104 = vsel %vm73, %v47, 0
    %106 = vmatpush.bf16.msra.mxu0 0
    %107 = vmatpush.bf16.msra.mxu0 0
    %108 = vmatpush.bf16.msra.mxu0 0
    %109 = vmatpush.bf16.msra.mxu0 0
    %110 = vmatpush.bf16.msra.mxu0 0
    %111 = vmatpush.bf16.msra.mxu0 0
    %112 = vmatpush.bf16.msra.mxu0 %v100
    %113 = vmatpush.bf16.msra.mxu0 %v99
    %114 = vmatmul.bf16.gmra.mxu0 %v104
    %v115 = vpop.f32.mrf.mxu0
    %v116 = vadd.f32 %v87, %v115
    %v117 = vpop.f32.mrf.mxu0
    %v118 = vadd.f32 %v89, %v117
    %119 = vdwg.mxu0
    %v120 = vtanh.pop %v116
    %v121 = vtanh.pop %v118
    %122 = vst [vmem:[#allocation7] sm:$0xff] %v120
    %123 = vst [vmem:[#allocation7 + $0x8] sm:$0xff] %v121
    // Predicated region
    $region18: #{tpu_custom_call.1} parent=1 // pred_check
      _
    $region19: #{tpu_custom_call.1} parent=1 // pred_check_branch
      %125 = sbr.rel (0) target = $region21
    $region20: #{tpu_custom_call.1} parent=1 // pred_region
      %127 = vsyncadd [#allocation4], 0
      %s128 = sshll.u32 [#allocation7], 4
      %s129 = int_to_ptr.vmem [resolvable:$true] %s128
      %s130 = sshll.u32 %s2, 4
      %s131 = int_to_ptr.hbm [resolvable:$true] %s130
      %136 = dma.vmem_to_hbm [thread:$0]  %s129, 256, %s131, [#allocation4], 128, 128, 8
    $region21: #{tpu_custom_call.1} parent=1 // pred_fallthru
      _
    // Predicated region
    $region22: #{tpu_custom_call.1} parent=1 // pred_check
      _
    $region23: #{tpu_custom_call.1} parent=1 // pred_check_branch
      %138 = sbr.rel (0) target = $region25
    $region24: #{tpu_custom_call.1} parent=1 // pred_region
      %140 = dma.done [#allocation4], 256
    $region25: #{tpu_custom_call.1} parent=1 // pred_fallthru
      _
    %141 = vsyncpa [#allocation3], 1
    %142 = vsyncpa [#allocation6], 1
    %143 = vsyncpa [#allocation4], 1

</llo_original>
